<compile_context>
chip_gen: v5e
topology: v5e:2x2
jax: 0.10.0
libtpu: 0.0.40
codegen_flags: <defaults>
</compile_context>

<pallas_src>
import math
import jax
import jax.numpy as jnp
from jax.experimental import pallas as pl
from jax.experimental.pallas import tpu as pltpu


# ----------------------------------------------------------------------------
# Kernel
# ----------------------------------------------------------------------------
def actor_kernel(x_ref, w1_ref, aff_ref, w2b_ref, o_ref):
    eps = jnp.float32(1e-5)

    x = x_ref[...].astype(jnp.float32)                        # (B, S)

    # ---- fc1 (bias omitted: exactly cancelled by training-mode BatchNorm) ----
    h = jnp.dot(x, w1_ref[...], preferred_element_type=jnp.float32)  # (B, H)

    # Packed per-feature affine params: one (8, H) slab, rows 0..3 used.
    aff = aff_ref[...]
    bn_g = aff[0:1, :]
    bn_b = aff[1:2, :]
    ln_g = aff[2:3, :]
    ln_b = aff[3:4, :]

    # ---- BatchNorm1d (batch statistics over axis 0, biased variance) ----
    mu_b = jnp.mean(h, axis=0, keepdims=True)                 # (1, H)
    hc = h - mu_b
    var_b = jnp.mean(hc * hc, axis=0, keepdims=True)
    h = hc * jax.lax.rsqrt(var_b + eps) * bn_g + bn_b

    # ---- LayerNorm over features (biased variance) ----
    mu_l = jnp.mean(h, axis=1, keepdims=True)                 # (B, 1)
    hc = h - mu_l
    var_l = jnp.mean(hc * hc, axis=1, keepdims=True)
    h = hc * jax.lax.rsqrt(var_l + eps) * ln_g + ln_b

    # ---- tanh ----
    h = jnp.tanh(h)

    # ---- fc2 (weights + bias packed in one slab) + tanh ----
    H = w2b_ref.shape[0] - 1
    w2b = w2b_ref[...]                                         # (H+1, A)
    w2 = w2b[:H, :]
    b2 = w2b[H:, :]                                            # (1, A)
    y = jnp.dot(h, w2, preferred_element_type=jnp.float32) + b2
    o_ref[...] = jnp.tanh(y).astype(o_ref.dtype)


# ----------------------------------------------------------------------------
# Wrappers
# ----------------------------------------------------------------------------
def actor_forward(state, prepped):
    """state: (B, state_dim) float32. prepped: dict from prepare_actor_params."""
    B = state.shape[0]
    S, H = prepped["w1"].shape
    A = prepped["w2b"].shape[1]

    vmem = pl.BlockSpec(memory_space=pltpu.MemorySpace.VMEM)

    cost = pl.CostEstimate(
        flops=2 * B * S * H + 2 * B * H * A + 12 * B * H,
        transcendentals=B * H + B * A,
        bytes_accessed=4 * (B * S + S * H + 8 * H + (H + 1) * A + B * A),
    )

    return pl.pallas_call(
        actor_kernel,
        out_shape=jax.ShapeDtypeStruct((B, A), jnp.float32),
        in_specs=[vmem, vmem, vmem, vmem],
        out_specs=vmem,
        cost_estimate=cost,
    )(state, prepped["w1"], prepped["aff"], prepped["w2b"])


def prepare_actor_params(params):
    """One-time packing of raw params into kernel-ready arrays (hoisted out of
    the per-call path)."""
    f32 = jnp.float32
    H = params["w1"].shape[1]
    A = params["w2"].shape[1]

    # Per-feature vectors -> one sublane-aligned (8, H) slab.
    # Rows: 0=bn_gamma, 1=bn_beta, 2=ln_gamma, 3=ln_beta, 4..7=zero pad.
    # (b1 intentionally not shipped: no-op through training-mode BatchNorm.)
    aff = jnp.concatenate(
        [params["bn_g"].reshape(1, H).astype(f32),
         params["bn_b"].reshape(1, H).astype(f32),
         params["ln_g"].reshape(1, H).astype(f32),
         params["ln_b"].reshape(1, H).astype(f32),
         jnp.zeros((4, H), f32)],
        axis=0)

    # fc2 weight + bias in one slab: rows 0..H-1 = W2 (in, out), row H = b2.
    w2b = jnp.concatenate(
        [params["w2"].astype(f32), params["b2"].reshape(1, A).astype(f32)],
        axis=0)

    return {"w1": params["w1"].astype(f32), "aff": aff, "w2b": w2b}


def init_actor_params(key, state_dim, action_dim):
    h1_dim = int((state_dim + action_dim) / 2)
    k1, k2, k3, k4 = jax.random.split(key, 4)

    def xavier_uniform(k, fan_in, fan_out):
        bound = math.sqrt(6.0 / (fan_in + fan_out))
        # stored transposed: (in, out) so the kernel does x @ W
        return jax.random.uniform(k, (fan_in, fan_out), jnp.float32,
                                  -bound, bound)

    def linear_bias(k, fan_in, fan_out):
        bound = 1.0 / math.sqrt(fan_in)
        return jax.random.uniform(k, (1, fan_out), jnp.float32, -bound, bound)

    return {
        "w1": xavier_uniform(k1, state_dim, h1_dim),
        "b1": linear_bias(k2, state_dim, h1_dim),
        "bn_g": jnp.ones((1, h1_dim), jnp.float32),
        "bn_b": jnp.zeros((1, h1_dim), jnp.float32),
        "ln_g": jnp.ones((1, h1_dim), jnp.float32),
        "ln_b": jnp.zeros((1, h1_dim), jnp.float32),
        "w2": xavier_uniform(k3, h1_dim, action_dim),
        "b2": linear_bias(k4, h1_dim, action_dim),
    }


def reference_forward(state, params):
    """Pure-JAX reference of the PyTorch module (training-mode BN), b1 included."""
    eps = 1e-5
    h = state @ params["w1"] + params["b1"]
    mu = jnp.mean(h, axis=0, keepdims=True)
    var = jnp.mean((h - mu) ** 2, axis=0, keepdims=True)
    h = (h - mu) / jnp.sqrt(var + eps) * params["bn_g"] + params["bn_b"]
    mu = jnp.mean(h, axis=1, keepdims=True)
    var = jnp.mean((h - mu) ** 2, axis=1, keepdims=True)
    h = (h - mu) / jnp.sqrt(var + eps) * params["ln_g"] + params["ln_b"]
    h = jnp.tanh(h)
    return jnp.tanh(h @ params["w2"] + params["b2"])


if __name__ == "__main__":
    key = jax.random.PRNGKey(0)
    k_params, k_state = jax.random.split(key)

    STATE_DIM = 32
    ACTION_DIM = 8
    BATCH = 8          # NOTE: training-mode BatchNorm requires BATCH > 1

    raw_params = init_actor_params(k_params, STATE_DIM, ACTION_DIM)
    prepped = jax.tree_util.tree_map(
        jax.block_until_ready, prepare_actor_params(raw_params))
    state = jax.random.normal(k_state, (BATCH, STATE_DIM), jnp.float32)

    forward = jax.jit(actor_forward)
    action = forward(state, prepped)
    jax.block_until_ready(action)

    assert action.shape == (BATCH, ACTION_DIM)
    assert bool(jnp.all(jnp.isfinite(action)))
    assert bool(jnp.all(jnp.abs(action) <= 1.0))

    ref = reference_forward(state, raw_params)
    assert bool(jnp.allclose(action, ref, rtol=1e-4, atol=1e-5)), (
        "mismatch vs pure-JAX reference")

    print("KERNEL_OK")
</pallas_src>

<mosaic_0001>
module attributes {stable_mosaic.version = 11 : i64} {
  func.func @actor_kernel(%arg0: memref<8x32xf32, #tpu.memory_space<vmem>>, %arg1: memref<32x20xf32, #tpu.memory_space<vmem>>, %arg2: memref<8x20xf32, #tpu.memory_space<vmem>>, %arg3: memref<21x8xf32, #tpu.memory_space<vmem>>, %arg4: memref<8x8xf32, #tpu.memory_space<vmem>>) attributes {dimension_semantics = [], scalar_prefetch = 0 : i64, scratch_operands = 0 : i64, tpu.core_type = #tpu.core_type<tc>} {
    %c0 = arith.constant 0 : index
    %c0_0 = arith.constant 0 : index
    %0 = vector.load %arg0[%c0, %c0_0] : memref<8x32xf32, #tpu.memory_space<vmem>>, vector<8x32xf32>
    %c0_1 = arith.constant 0 : index
    %c0_2 = arith.constant 0 : index
    %1 = vector.load %arg1[%c0_1, %c0_2] : memref<32x20xf32, #tpu.memory_space<vmem>>, vector<32x20xf32>
    %cst = arith.constant dense<0.000000e+00> : vector<8x20xf32>
    %2 = tpu.matmul %0, %1, %cst {dimension_numbers = #tpu.dot_dimension_numbers<[1], [0], [0], [1], [0, 0, 1, 1], [], []>} : vector<8x32xf32>, vector<32x20xf32>, vector<8x20xf32> -> vector<8x20xf32>
    %c0_3 = arith.constant 0 : index
    %c0_4 = arith.constant 0 : index
    %3 = vector.load %arg2[%c0_3, %c0_4] : memref<8x20xf32, #tpu.memory_space<vmem>>, vector<8x20xf32>
    %4 = vector.extract_strided_slice %3 {offsets = [0, 0], sizes = [1, 20], strides = [1, 1]} : vector<8x20xf32> to vector<1x20xf32>
    %5 = vector.extract_strided_slice %3 {offsets = [1, 0], sizes = [1, 20], strides = [1, 1]} : vector<8x20xf32> to vector<1x20xf32>
    %6 = vector.extract_strided_slice %3 {offsets = [2, 0], sizes = [1, 20], strides = [1, 1]} : vector<8x20xf32> to vector<1x20xf32>
    %7 = vector.extract_strided_slice %3 {offsets = [3, 0], sizes = [1, 20], strides = [1, 1]} : vector<8x20xf32> to vector<1x20xf32>
    %cst_5 = arith.constant dense<0.000000e+00> : vector<20xf32>
    %8 = vector.multi_reduction <add>, %2, %cst_5 [0] : vector<8x20xf32> to vector<20xf32>
    %9 = vector.shape_cast %8 : vector<20xf32> to vector<1x20xf32>
    %cst_6 = arith.constant 8.000000e+00 : f32
    %10 = vector.broadcast %cst_6 : f32 to vector<1x20xf32>
    %11 = arith.divf %9, %10 : vector<1x20xf32>
    %12 = vector.broadcast %11 : vector<1x20xf32> to vector<8x20xf32>
    %13 = arith.subf %2, %12 : vector<8x20xf32>
    %14 = arith.mulf %13, %13 : vector<8x20xf32>
    %cst_7 = arith.constant dense<0.000000e+00> : vector<20xf32>
    %15 = vector.multi_reduction <add>, %14, %cst_7 [0] : vector<8x20xf32> to vector<20xf32>
    %16 = vector.shape_cast %15 : vector<20xf32> to vector<1x20xf32>
    %cst_8 = arith.constant 8.000000e+00 : f32
    %17 = vector.broadcast %cst_8 : f32 to vector<1x20xf32>
    %18 = arith.divf %16, %17 : vector<1x20xf32>
    %cst_9 = arith.constant 9.99999974E-6 : f32
    %19 = vector.broadcast %cst_9 : f32 to vector<1x20xf32>
    %20 = arith.addf %18, %19 : vector<1x20xf32>
    %21 = math.rsqrt %20 : vector<1x20xf32>
    %22 = vector.broadcast %21 : vector<1x20xf32> to vector<8x20xf32>
    %23 = arith.mulf %13, %22 : vector<8x20xf32>
    %24 = vector.broadcast %4 : vector<1x20xf32> to vector<8x20xf32>
    %25 = arith.mulf %23, %24 : vector<8x20xf32>
    %26 = vector.broadcast %5 : vector<1x20xf32> to vector<8x20xf32>
    %27 = arith.addf %25, %26 : vector<8x20xf32>
    %cst_10 = arith.constant dense<0.000000e+00> : vector<8xf32>
    %28 = vector.multi_reduction <add>, %27, %cst_10 [1] : vector<8x20xf32> to vector<8xf32>
    %29 = vector.shape_cast %28 : vector<8xf32> to vector<8x1xf32>
    %cst_11 = arith.constant 2.000000e+01 : f32
    %30 = vector.broadcast %cst_11 : f32 to vector<8x1xf32>
    %31 = arith.divf %29, %30 : vector<8x1xf32>
    %32 = vector.broadcast %31 : vector<8x1xf32> to vector<8x20xf32>
    %33 = arith.subf %27, %32 : vector<8x20xf32>
    %34 = arith.mulf %33, %33 : vector<8x20xf32>
    %cst_12 = arith.constant dense<0.000000e+00> : vector<8xf32>
    %35 = vector.multi_reduction <add>, %34, %cst_12 [1] : vector<8x20xf32> to vector<8xf32>
    %36 = vector.shape_cast %35 : vector<8xf32> to vector<8x1xf32>
    %cst_13 = arith.constant 2.000000e+01 : f32
    %37 = vector.broadcast %cst_13 : f32 to vector<8x1xf32>
    %38 = arith.divf %36, %37 : vector<8x1xf32>
    %cst_14 = arith.constant 9.99999974E-6 : f32
    %39 = vector.broadcast %cst_14 : f32 to vector<8x1xf32>
    %40 = arith.addf %38, %39 : vector<8x1xf32>
    %41 = math.rsqrt %40 : vector<8x1xf32>
    %42 = vector.broadcast %41 : vector<8x1xf32> to vector<8x20xf32>
    %43 = arith.mulf %33, %42 : vector<8x20xf32>
    %44 = vector.broadcast %6 : vector<1x20xf32> to vector<8x20xf32>
    %45 = arith.mulf %43, %44 : vector<8x20xf32>
    %46 = vector.broadcast %7 : vector<1x20xf32> to vector<8x20xf32>
    %47 = arith.addf %45, %46 : vector<8x20xf32>
    %48 = math.tanh %47 : vector<8x20xf32>
    %c0_15 = arith.constant 0 : index
    %c0_16 = arith.constant 0 : index
    %49 = vector.load %arg3[%c0_15, %c0_16] : memref<21x8xf32, #tpu.memory_space<vmem>>, vector<21x8xf32>
    %50 = vector.extract_strided_slice %49 {offsets = [0, 0], sizes = [20, 8], strides = [1, 1]} : vector<21x8xf32> to vector<20x8xf32>
    %51 = vector.extract_strided_slice %49 {offsets = [20, 0], sizes = [1, 8], strides = [1, 1]} : vector<21x8xf32> to vector<1x8xf32>
    %cst_17 = arith.constant dense<0.000000e+00> : vector<8x8xf32>
    %52 = tpu.matmul %48, %50, %cst_17 {dimension_numbers = #tpu.dot_dimension_numbers<[1], [0], [0], [1], [0, 0, 1, 1], [], []>} : vector<8x20xf32>, vector<20x8xf32>, vector<8x8xf32> -> vector<8x8xf32>
    %53 = vector.broadcast %51 : vector<1x8xf32> to vector<8x8xf32>
    %54 = arith.addf %52, %53 : vector<8x8xf32>
    %55 = math.tanh %54 : vector<8x8xf32>
    %c0_18 = arith.constant 0 : index
    %c0_19 = arith.constant 0 : index
    %56 = vector.load %arg4[%c0_18, %c0_19] : memref<8x8xf32, #tpu.memory_space<vmem>>, vector<8x8xf32>
    tpu.vector_store %arg4[%c0_18, %c0_19], %55 {strides = array<i32>} : memref<8x8xf32, #tpu.memory_space<vmem>>, vector<8x8xf32>,
    return
  }
}

</mosaic_0001>

<llo_original>
// kernel: actor_forward.1
$region0: #{actor_forward.1}
  #allocation0 [shape = 'u32[]', space=smem, size = 0x4, offset = 0x4, fixed_abs, tag = 'smem constant byte address 0x4 - core index']
  #allocation1 [shape = 'u32[72,128]{1,0:T(1,128)}', space=vmem, size = 0x9000, scoped, tag = 'internal scratch']
  %s0 = inlined_call_operand.vmem [shape: f32[8,32], index: 0, kind: input, shape index: {}]
  %s1 = inlined_call_operand.vmem [shape: f32[32,20], index: 1, kind: input, shape index: {}]
  %s2 = inlined_call_operand.vmem [shape: f32[8,20], index: 2, kind: input, shape index: {}]
  %s3 = inlined_call_operand.vmem [shape: f32[21,8], index: 3, kind: input, shape index: {}]
  %s4 = inlined_call_operand.hbm [shape: f32[8,8], index: 4, kind: output, shape index: {}]
  %s5 = sld [smem:[#allocation0]]
  $region26: #{actor_forward.1} parent=0
    _
  %s7 = ssub.s32 1, %s5
  %s8 = scalar_select 0, %s7, %s5
  $region1: #{actor_forward.1} parent=0
    #allocation2 [shape = 'u8[4096]{0}', space=vmem, size = 0x1000, scoped, tag = 'output window, operand 0, single buffered']
    #allocation3 [shape = 's32[1]{0}', space=sflag, size = 0x4, scoped, tag = 'scoped memory for actor_forward.1']
    %9 = vsyncpa [#allocation3], 0
    // Predicated region
    $region2: #{actor_forward.1} parent=1 // pred_check
      _
    $region3: #{actor_forward.1} parent=1 // pred_check_branch
      %11 = sbr.rel (0) target = $region5
    $region4: #{actor_forward.1} parent=1 // pred_region
      _
    $region5: #{actor_forward.1} parent=1 // pred_fallthru
      _
    // Predicated region
    $region6: #{actor_forward.1} parent=1 // pred_check
      _
    $region7: #{actor_forward.1} parent=1 // pred_check_branch
      %13 = sbr.rel (0) target = $region9
    $region8: #{actor_forward.1} parent=1 // pred_region
      _
    $region9: #{actor_forward.1} parent=1 // pred_fallthru
      _
    // Predicated region
    $region10: #{actor_forward.1} parent=1 // pred_check
      _
    $region11: #{actor_forward.1} parent=1 // pred_check_branch
      %15 = sbr.rel (0) target = $region13
    $region12: #{actor_forward.1} parent=1 // pred_region
      _
    $region13: #{actor_forward.1} parent=1 // pred_fallthru
      _
    // Predicated region
    $region14: #{actor_forward.1} parent=1 // pred_check
      _
    $region15: #{actor_forward.1} parent=1 // pred_check_branch
      %17 = sbr.rel (0) target = $region17
    $region16: #{actor_forward.1} parent=1 // pred_region
      _
    $region17: #{actor_forward.1} parent=1 // pred_fallthru
      _
    %v18 = vld [vmem:[%s0] sm:$0xff]
    %v19 = vld [vmem:[%s1] sm:$0xff]
    %v20 = vld [vmem:[%s1 + $0x8] sm:$0xff]
    %v21 = vld [vmem:[%s1 + $0x10] sm:$0xff]
    %v22 = vld [vmem:[%s1 + $0x18] sm:$0xff]
    %vm23 = vcmask 261120
    %v25 = vsel %vm23, %v18, 0
    %27 = vmatpush.msra.mxu0 0.0
    %28 = vmatpush.msra.mxu0 0.0
    %29 = vmatpush.msra.mxu0 0.0
    %30 = vmatpush.msra.mxu0 0.0
    %31 = vmatpush.msra.mxu0 0.0
    %32 = vmatpush.msra.mxu0 0.0
    %33 = vmatpush.msra.mxu0 0.0
    %34 = vmatpush.msra.mxu0 0.0
    %35 = vmatpush.msra.mxu0 0.0
    %36 = vmatpush.msra.mxu0 0.0
    %37 = vmatpush.msra.mxu0 0.0
    %38 = vmatpush.msra.mxu0 0.0
    %39 = vmatpush.msra.mxu0 %v22
    %40 = vmatpush.msra.mxu0 %v21
    %41 = vmatpush.msra.mxu0 %v20
    %42 = vmatpush.msra.mxu0 %v19
    %43 = vmatmul.f32.gmra.mxu0 %v25
    %v44 = vpop.f32.mrf.mxu0
    %v45 = vadd.f32 0.0, %v44
    %46 = vdwg.mxu0
    %v47 = vld [vmem:[%s2] sm:$0xff]
    %vm48 = vcmask 162816
    %v49 = vsel %vm48, %v45, 0.0
    %v50 = vrot.slane %v49, 4
    %v51 = vadd.f32 %v49, %v50
    %v52 = vrot.slane %v51, 2
    %v53 = vadd.f32 %v51, %v52
    %v54 = vrot.slane %v53, 1
    %v55 = vadd.f32 %v53, %v54
    %v56 = vrcp.pop 8.0
    %v57 = vmul.f32 8.0, %v56
    %v58 = vsub.f32 1.0, %v57
    %v59 = vmul.f32 %v56, %v58
    %v60 = vadd.f32 %v56, %v59
    %vm61 = vweird.f32 %v56
    %v62 = vsel %vm61, %v56, %v60
    %v63 = vmul.f32 %v55, %v62
    %v64 = vsub.f32 %v45, %v63
    %v65 = vmul.f32 %v64, %v64
    %v66 = vsel %vm48, %v65, 0.0
    %v67 = vrot.slane %v66, 4
    %v68 = vadd.f32 %v66, %v67
    %v69 = vrot.slane %v68, 2
    %v70 = vadd.f32 %v68, %v69
    %v71 = vrot.slane %v70, 1
    %v72 = vadd.f32 %v70, %v71
    %v73 = vmul.f32 %v72, %v62
    %v74 = vadd.f32 %v73, 1e-05
    %v75 = vrsqrt.pop %v74
    %v76 = vmul.f32 %v75, %v74
    %v77 = vmul.f32 %v76, %v75
    %v78 = vmul.f32 0.5, %v77
    %v79 = vsub.f32 1.5, %v78
    %v80 = vmul.f32 %v75, %v79
    %vm81 = vweird.f32 %v74
    %vm82 = vweird.f32 %v75
    %vm83 = vmor %vm81, %vm82
    %v84 = vsel %vm83, %v75, %v80
    %v85 = vmul.f32 %v64, %v84
    %v86 = vperm.slane %v47, 0
    %v87 = vmul.f32 %v85, %v86
    %v88 = vperm.slane %v47, 1
    %v89 = vadd.f32 %v87, %v88
    %v90 = vsel %vm48, %v89, 0.0
    %91 = vadd.xlane.f32.xlu0 %v90
    %v92 = vpop.xlane.xlu0 %91
    %v93 = vrcp.pop 20.0
    %v94 = vmul.f32 20.0, %v93
    %v95 = vsub.f32 1.0, %v94
    %v96 = vmul.f32 %v93, %v95
    %v97 = vadd.f32 %v93, %v96
    %vm98 = vweird.f32 %v93
    %v99 = vsel %vm98, %v93, %v97
    %v100 = vmul.f32 %v92, %v99
    %v101 = vsub.f32 %v89, %v100
    %v102 = vmul.f32 %v101, %v101
    %v103 = vsel %vm48, %v102, 0.0
    %104 = vadd.xlane.f32.xlu0 %v103
    %v105 = vpop.xlane.xlu0 %104
    %v106 = vmul.f32 %v105, %v99
    %v107 = vadd.f32 %v106, 1e-05
    %v108 = vrsqrt.pop %v107
    %v109 = vmul.f32 %v108, %v107
    %v110 = vmul.f32 %v109, %v108
    %v111 = vmul.f32 0.5, %v110
    %v112 = vsub.f32 1.5, %v111
    %v113 = vmul.f32 %v108, %v112
    %vm114 = vweird.f32 %v107
    %vm115 = vweird.f32 %v108
    %vm116 = vmor %vm114, %vm115
    %v117 = vsel %vm116, %v108, %v113
    %v118 = vmul.f32 %v101, %v117
    %v119 = vperm.slane %v47, 2
    %v120 = vmul.f32 %v118, %v119
    %v121 = vperm.slane %v47, 3
    %v122 = vadd.f32 %v120, %v121
    %v123 = vtanh.pop %v122
    %v124 = vld [vmem:[%s3] sm:$0xff]
    %v125 = vld [vmem:[%s3 + $0x8] sm:$0xff]
    %v126 = vld [vmem:[%s3 + $0x10] sm:$0x1f]
    %v127 = vperm.slane %v126, 4
    %v129 = vsel %vm48, %v123, 0
    %vm131 = vcmask 1043456
    %v133 = vsel %vm131, %v126, 0
    %135 = vmatpush.msra.mxu0 0.0
    %136 = vmatpush.msra.mxu0 0.0
    %137 = vmatpush.msra.mxu0 0.0
    %138 = vmatpush.msra.mxu0 0.0
    %139 = vmatpush.msra.mxu0 0.0
    %140 = vmatpush.msra.mxu0 0.0
    %141 = vmatpush.msra.mxu0 0.0
    %142 = vmatpush.msra.mxu0 0.0
    %143 = vmatpush.msra.mxu0 0.0
    %144 = vmatpush.msra.mxu0 0.0
    %145 = vmatpush.msra.mxu0 0.0
    %146 = vmatpush.msra.mxu0 0.0
    %147 = vmatpush.msra.mxu0 0.0
    %148 = vmatpush.msra.mxu0 %v133
    %149 = vmatpush.msra.mxu0 %v125
    %150 = vmatpush.msra.mxu0 %v124
    %151 = vmatmul.f32.gmra.mxu0 %v129
    %v152 = vpop.f32.mrf.mxu0
    %v153 = vadd.f32 %v127, %v152
    %154 = vdwg.mxu0
    %v155 = vtanh.pop %v153
    %vm156 = vcmask 64512
    %157 = vst.msk [vmem:[#allocation2] sm:$0xff] %vm156, %v155
    // Predicated region
    $region18: #{actor_forward.1} parent=1 // pred_check
      _
    $region19: #{actor_forward.1} parent=1 // pred_check_branch
      %159 = sbr.rel (0) target = $region21
    $region20: #{actor_forward.1} parent=1 // pred_region
      %161 = vsyncadd [#allocation3], 0
      %s163 = sshll.u32 [#allocation2], 4
      %s164 = int_to_ptr.vmem [resolvable:$true] %s163
      %s165 = sshll.u32 %s4, 4
      %s166 = int_to_ptr.hbm [resolvable:$true] %s165
      %168 = dma.vmem_to_hbm [thread:$0]  %s164, 128, %s166, [#allocation3]
    $region21: #{actor_forward.1} parent=1 // pred_fallthru
      _
    // Predicated region
    $region22: #{actor_forward.1} parent=1 // pred_check
      _
    $region23: #{actor_forward.1} parent=1 // pred_check_branch
      %170 = sbr.rel (0) target = $region25
    $region24: #{actor_forward.1} parent=1 // pred_region
      %172 = dma.done [#allocation3], 128
    $region25: #{actor_forward.1} parent=1 // pred_fallthru
      _
    %173 = vsyncpa [#allocation3], 1

</llo_original>
